<compile_context>
chip_gen: v7x
topology: tpu7x:2x2x1
jax: 0.10.0
libtpu: 0.0.40
codegen_flags: <defaults>
</compile_context>

<pallas_src>
import math

import jax
import jax.numpy as jnp
from jax.experimental import pallas as pl
from jax.experimental.pallas import tpu as pltpu


def network_kernel(x_ref, w1_ref, b1_ref, wh_ref, bh_ref,
                   wq_ref, bq_ref, segsum_ref, zblock_ref, q_ref):
    x = x_ref[...]

    # feature layer: Linear + ReLU                                   [TB, H]
    feat = jnp.maximum(
        jnp.dot(x, w1_ref[...], preferred_element_type=jnp.float32) + b1_ref[...],
        0.0)

    # fused value/advantage hidden layers: one matmul, h = [vh | ah]  [TB, 2H]
    h = jnp.maximum(
        jnp.dot(feat, wh_ref[...], preferred_element_type=jnp.float32) + bh_ref[...],
        0.0)

    # dueling combine folded into wq/bq:
    #   q_atoms[b, o*A + a] = val[b, a] + adv[b, o*A + a] - mean_o' adv[b, o'*A + a]
    q_atoms = jnp.dot(h, wq_ref[...], preferred_element_type=jnp.float32) + bq_ref[...]

    # softmax over atoms within each action segment, on the full [TB, O*A] lane row.
    # Row-global max is constant within every segment -> per-segment softmax is exact.
    m = jnp.max(q_atoms, axis=-1, keepdims=True)          # one XLU reduce
    e = jnp.exp(q_atoms - m)                              # one full-row EUP pass
    # per-segment sums, tiled back to [TB, O*A], via one MXU matmul (block-diag ones)
    s = jnp.dot(e, segsum_ref[...], preferred_element_type=jnp.float32)
    prob = e / s                                          # exact (keeps ref-level accuracy)
    prob = jnp.maximum(prob, 0.001)                       # clamp(min=0.001)

    # expectation over z per action: one MXU matmul, single output store
    q_ref[...] = jnp.dot(prob, zblock_ref[...], preferred_element_type=jnp.float32)


def network_forward(x, kp):
    batch = x.shape[0]
    in_dim = x.shape[1]
    out_dim = kp["zblock"].shape[1]

    # batch tile: whole batch for small B; otherwise a multiple of 8 that divides B
    if batch % 8 == 0:
        tb = min(batch, 256)
        while batch % tb != 0:
            tb //= 2
    else:
        tb = batch
    grid = (batch // tb,)

    const_map = lambda i: (0, 0)
    weight_names = ("w1", "b1", "wh", "bh", "wq", "bq", "segsum", "zblock")
    in_specs = [pl.BlockSpec((tb, in_dim), lambda i: (i, 0))]
    in_specs += [pl.BlockSpec(kp[n].shape, const_map) for n in weight_names]
    out_spec = pl.BlockSpec((tb, out_dim), lambda i: (i, 0))

    return pl.pallas_call(
        network_kernel,
        out_shape=jax.ShapeDtypeStruct((batch, out_dim), jnp.float32),
        grid_spec=pltpu.PrefetchScalarGridSpec(
            num_scalar_prefetch=0,
            grid=grid,
            in_specs=in_specs,
            out_specs=out_spec,
        ),
        compiler_params=pltpu.CompilerParams(
            dimension_semantics=("parallel",)),   # batch axis -> both TCs on v7x
    )(x, *(kp[n] for n in weight_names))


# ---------------- deterministic parameter construction (plain JAX glue) ----------------

def _scale_noise(key, size):
    v = jax.random.normal(key, (size,), dtype=jnp.float32)
    return jnp.sign(v) * jnp.sqrt(jnp.abs(v))


def _linear_params(key, in_size, out_size):
    k1, k2 = jax.random.split(key)
    r = 1.0 / math.sqrt(in_size)
    w = jax.random.uniform(k1, (out_size, in_size), minval=-r, maxval=r, dtype=jnp.float32)
    b = jax.random.uniform(k2, (out_size,), minval=-r, maxval=r, dtype=jnp.float32)
    return w.T, b.reshape(1, -1)


def _noisy_linear_params(key, in_size, out_size, std_init=0.5):
    k1, k2, k3, k4 = jax.random.split(key, 4)
    r = 1.0 / math.sqrt(in_size)
    w_mu = jax.random.uniform(k1, (out_size, in_size), minval=-r, maxval=r, dtype=jnp.float32)
    w_sigma = jnp.full((out_size, in_size), std_init / math.sqrt(in_size), dtype=jnp.float32)
    b_mu = jax.random.uniform(k2, (out_size,), minval=-r, maxval=r, dtype=jnp.float32)
    b_sigma = jnp.full((out_size,), std_init / math.sqrt(out_size), dtype=jnp.float32)
    eps_in = _scale_noise(k3, in_size)
    eps_out = _scale_noise(k4, out_size)
    w = w_mu + w_sigma * jnp.outer(eps_out, eps_in)   # effective weight (out, in)
    b = b_mu + b_sigma * eps_out
    return w.T, b.reshape(1, -1)


def make_params(key, input_size, hidden_size, output_size, atom_size):
    keys = jax.random.split(key, 5)
    w1, b1 = _linear_params(keys[0], input_size, hidden_size)
    wvh, bvh = _noisy_linear_params(keys[1], hidden_size, hidden_size)
    wv, bv = _noisy_linear_params(keys[2], hidden_size, atom_size)
    wah, bah = _noisy_linear_params(keys[3], hidden_size, hidden_size)
    wa, ba = _noisy_linear_params(keys[4], hidden_size, output_size * atom_size)
    return dict(w1=w1, b1=b1, wvh=wvh, bvh=bvh, wv=wv, bv=bv,
                wah=wah, bah=bah, wa=wa, ba=ba)


def prepare_kernel_params(params, z, output_size, atom_size):
    """One-time folding of the dueling head into kernel-friendly operands."""
    A, O = atom_size, output_size
    f32 = jnp.float32

    # fused value/advantage hidden layer
    wh = jnp.concatenate([params["wvh"], params["wah"]], axis=1)   # [H, 2H]
    bh = jnp.concatenate([params["bvh"], params["bah"]], axis=1)   # [1, 2H]

    eyeA = jnp.eye(A, dtype=f32)
    tileA = jnp.tile(eyeA, (1, O))                                 # [A, O*A]: val -> tiled
    mean_m = jnp.tile(eyeA, (O, O)) / O                            # [O*A, O*A]: mean over actions
    id_minus_m = jnp.eye(O * A, dtype=f32) - mean_m

    # dueling combine folded into a single linear map on h = [vh | ah]
    wq = jnp.concatenate([params["wv"] @ tileA,
                          params["wa"] @ id_minus_m], axis=0)      # [2H, O*A]
    bq = params["bv"] @ tileA + params["ba"] @ id_minus_m          # [1, O*A]

    # per-segment sum (block-diagonal ones) and z-expectation block matrices
    segsum = jnp.kron(jnp.eye(O, dtype=f32), jnp.ones((A, A), f32))        # [O*A, O*A]
    zblock = jnp.kron(jnp.eye(O, dtype=f32), z.reshape(A, 1).astype(f32))  # [O*A, O]

    return dict(w1=params["w1"], b1=params["b1"], wh=wh, bh=bh,
                wq=wq, bq=bq, segsum=segsum, zblock=zblock)


def reference_forward(x, p, z, output_size, atom_size):
    feat = jnp.maximum(x @ p["w1"] + p["b1"], 0.0)
    ah = jnp.maximum(feat @ p["wah"] + p["bah"], 0.0)
    adv = (ah @ p["wa"] + p["ba"]).reshape(-1, output_size, atom_size)
    vh = jnp.maximum(feat @ p["wvh"] + p["bvh"], 0.0)
    val = (vh @ p["wv"] + p["bv"]).reshape(-1, 1, atom_size)
    q_atoms = val + adv - jnp.mean(adv, axis=1, keepdims=True)
    prob = jax.nn.softmax(q_atoms, axis=-1)
    prob = jnp.clip(prob, 0.001)
    return jnp.sum(prob * z.reshape(1, 1, atom_size), axis=2)


if __name__ == "__main__":
    input_size, hidden_size, output_size, atom_size = 32, 32, 8, 16

    key = jax.random.PRNGKey(0)
    k_params, k_x = jax.random.split(key)

    params = make_params(k_params, input_size, hidden_size, output_size, atom_size)
    z = jnp.linspace(-10.0, 10.0, atom_size, dtype=jnp.float32).reshape(1, atom_size)
    kp = prepare_kernel_params(params, z, output_size, atom_size)

    for batch in (2, 16):
        x = jax.random.normal(jax.random.fold_in(k_x, batch),
                              (batch, input_size), dtype=jnp.float32)
        q = jax.block_until_ready(network_forward(x, kp))
        q_ref = reference_forward(x, params, z, output_size, atom_size)
        assert q.shape == (batch, output_size)
        assert jnp.allclose(q, q_ref, rtol=1e-4, atol=1e-4), \
            float(jnp.max(jnp.abs(q - q_ref)))

    print("KERNEL_OK")
</pallas_src>

<mosaic_0001>
module attributes {stable_mosaic.version = 11 : i64} {
  func.func @network_kernel(%arg0: i32, %arg1: memref<2x32xf32, #tpu.memory_space<vmem>>, %arg2: memref<32x32xf32, #tpu.memory_space<vmem>>, %arg3: memref<1x32xf32, #tpu.memory_space<vmem>>, %arg4: memref<32x64xf32, #tpu.memory_space<vmem>>, %arg5: memref<1x64xf32, #tpu.memory_space<vmem>>, %arg6: memref<64x128xf32, #tpu.memory_space<vmem>>, %arg7: memref<1x128xf32, #tpu.memory_space<vmem>>, %arg8: memref<128x128xf32, #tpu.memory_space<vmem>>, %arg9: memref<128x8xf32, #tpu.memory_space<vmem>>, %arg10: memref<2x8xf32, #tpu.memory_space<vmem>>) attributes {dimension_semantics = [#tpu.dimension_semantics<parallel>], iteration_bounds = array<i64: 1>, scalar_prefetch = 0 : i64, scratch_operands = 0 : i64, tpu.core_type = #tpu.core_type<tc>, window_params = [{transform_indices = @transform_0, window_bounds = array<i64: 2, 32>}, {pipeline_mode = #tpu.pipeline_mode<synchronous>, transform_indices = @transform_1, window_bounds = array<i64: 32, 32>}, {pipeline_mode = #tpu.pipeline_mode<synchronous>, transform_indices = @transform_2, window_bounds = array<i64: 1, 32>}, {pipeline_mode = #tpu.pipeline_mode<synchronous>, transform_indices = @transform_3, window_bounds = array<i64: 32, 64>}, {pipeline_mode = #tpu.pipeline_mode<synchronous>, transform_indices = @transform_4, window_bounds = array<i64: 1, 64>}, {pipeline_mode = #tpu.pipeline_mode<synchronous>, transform_indices = @transform_5, window_bounds = array<i64: 64, 128>}, {pipeline_mode = #tpu.pipeline_mode<synchronous>, transform_indices = @transform_6, window_bounds = array<i64: 1, 128>}, {pipeline_mode = #tpu.pipeline_mode<synchronous>, transform_indices = @transform_7, window_bounds = array<i64: 128, 128>}, {pipeline_mode = #tpu.pipeline_mode<synchronous>, transform_indices = @transform_8, window_bounds = array<i64: 128, 8>}, {transform_indices = @transform_9, window_bounds = array<i64: 2, 8>}]} {
    %c0 = arith.constant 0 : index
    %c0_0 = arith.constant 0 : index
    %0 = vector.load %arg1[%c0, %c0_0] : memref<2x32xf32, #tpu.memory_space<vmem>>, vector<2x32xf32>
    %c0_1 = arith.constant 0 : index
    %c0_2 = arith.constant 0 : index
    %1 = vector.load %arg2[%c0_1, %c0_2] : memref<32x32xf32, #tpu.memory_space<vmem>>, vector<32x32xf32>
    %cst = arith.constant dense<0.000000e+00> : vector<2x32xf32>
    %2 = tpu.matmul %0, %1, %cst {dimension_numbers = #tpu.dot_dimension_numbers<[1], [0], [0], [1], [0, 0, 1, 1], [], []>} : vector<2x32xf32>, vector<32x32xf32>, vector<2x32xf32> -> vector<2x32xf32>
    %c0_3 = arith.constant 0 : index
    %c0_4 = arith.constant 0 : index
    %3 = vector.load %arg3[%c0_3, %c0_4] : memref<1x32xf32, #tpu.memory_space<vmem>>, vector<1x32xf32>
    %4 = vector.broadcast %3 : vector<1x32xf32> to vector<2x32xf32>
    %5 = arith.addf %2, %4 : vector<2x32xf32>
    %cst_5 = arith.constant 0.000000e+00 : f32
    %6 = vector.broadcast %cst_5 : f32 to vector<2x32xf32>
    %7 = arith.maximumf %5, %6 : vector<2x32xf32>
    %c0_6 = arith.constant 0 : index
    %c0_7 = arith.constant 0 : index
    %8 = vector.load %arg4[%c0_6, %c0_7] : memref<32x64xf32, #tpu.memory_space<vmem>>, vector<32x64xf32>
    %cst_8 = arith.constant dense<0.000000e+00> : vector<2x64xf32>
    %9 = tpu.matmul %7, %8, %cst_8 {dimension_numbers = #tpu.dot_dimension_numbers<[1], [0], [0], [1], [0, 0, 1, 1], [], []>} : vector<2x32xf32>, vector<32x64xf32>, vector<2x64xf32> -> vector<2x64xf32>
    %c0_9 = arith.constant 0 : index
    %c0_10 = arith.constant 0 : index
    %10 = vector.load %arg5[%c0_9, %c0_10] : memref<1x64xf32, #tpu.memory_space<vmem>>, vector<1x64xf32>
    %11 = vector.broadcast %10 : vector<1x64xf32> to vector<2x64xf32>
    %12 = arith.addf %9, %11 : vector<2x64xf32>
    %cst_11 = arith.constant 0.000000e+00 : f32
    %13 = vector.broadcast %cst_11 : f32 to vector<2x64xf32>
    %14 = arith.maximumf %12, %13 : vector<2x64xf32>
    %c0_12 = arith.constant 0 : index
    %c0_13 = arith.constant 0 : index
    %15 = vector.load %arg6[%c0_12, %c0_13] : memref<64x128xf32, #tpu.memory_space<vmem>>, vector<64x128xf32>
    %cst_14 = arith.constant dense<0.000000e+00> : vector<2x128xf32>
    %16 = tpu.matmul %14, %15, %cst_14 {dimension_numbers = #tpu.dot_dimension_numbers<[1], [0], [0], [1], [0, 0, 1, 1], [], []>} : vector<2x64xf32>, vector<64x128xf32>, vector<2x128xf32> -> vector<2x128xf32>
    %c0_15 = arith.constant 0 : index
    %c0_16 = arith.constant 0 : index
    %17 = vector.load %arg7[%c0_15, %c0_16] : memref<1x128xf32, #tpu.memory_space<vmem>>, vector<1x128xf32>
    %18 = vector.broadcast %17 : vector<1x128xf32> to vector<2x128xf32>
    %19 = arith.addf %16, %18 : vector<2x128xf32>
    %cst_17 = arith.constant dense<0xFF800000> : vector<2xf32>
    %20 = vector.multi_reduction <maximumf>, %19, %cst_17 [1] : vector<2x128xf32> to vector<2xf32>
    %21 = vector.shape_cast %20 : vector<2xf32> to vector<2x1xf32>
    %22 = vector.broadcast %21 : vector<2x1xf32> to vector<2x128xf32>
    %23 = arith.subf %19, %22 : vector<2x128xf32>
    %24 = math.exp %23 : vector<2x128xf32>
    %c0_18 = arith.constant 0 : index
    %c0_19 = arith.constant 0 : index
    %25 = vector.load %arg8[%c0_18, %c0_19] : memref<128x128xf32, #tpu.memory_space<vmem>>, vector<128x128xf32>
    %cst_20 = arith.constant dense<0.000000e+00> : vector<2x128xf32>
    %26 = tpu.matmul %24, %25, %cst_20 {dimension_numbers = #tpu.dot_dimension_numbers<[1], [0], [0], [1], [0, 0, 1, 1], [], []>} : vector<2x128xf32>, vector<128x128xf32>, vector<2x128xf32> -> vector<2x128xf32>
    %27 = arith.divf %24, %26 : vector<2x128xf32>
    %cst_21 = arith.constant 1.000000e-03 : f32
    %28 = vector.broadcast %cst_21 : f32 to vector<2x128xf32>
    %29 = arith.maximumf %27, %28 : vector<2x128xf32>
    %c0_22 = arith.constant 0 : index
    %c0_23 = arith.constant 0 : index
    %30 = vector.load %arg9[%c0_22, %c0_23] : memref<128x8xf32, #tpu.memory_space<vmem>>, vector<128x8xf32>
    %cst_24 = arith.constant dense<0.000000e+00> : vector<2x8xf32>
    %31 = tpu.matmul %29, %30, %cst_24 {dimension_numbers = #tpu.dot_dimension_numbers<[1], [0], [0], [1], [0, 0, 1, 1], [], []>} : vector<2x128xf32>, vector<128x8xf32>, vector<2x8xf32> -> vector<2x8xf32>
    %c0_25 = arith.constant 0 : index
    %c0_26 = arith.constant 0 : index
    %32 = vector.load %arg10[%c0_25, %c0_26] : memref<2x8xf32, #tpu.memory_space<vmem>>, vector<2x8xf32>
    tpu.vector_store %arg10[%c0_25, %c0_26], %31 {strides = array<i32>} : memref<2x8xf32, #tpu.memory_space<vmem>>, vector<2x8xf32>,
    return
  }
  func.func @transform_0(%arg0: i32) -> (i32, i32) {
    %c0_i32 = arith.constant 0 : i32
    %c0_i32_0 = arith.constant 0 : i32
    return %arg0, %c0_i32 : i32, i32
  }
  func.func @transform_1(%arg0: i32) -> (i32, i32) {
    %c0_i32 = arith.constant 0 : i32
    %c0_i32_0 = arith.constant 0 : i32
    %c0_i32_1 = arith.constant 0 : i32
    return %c0_i32, %c0_i32_0 : i32, i32
  }
  func.func @transform_2(%arg0: i32) -> (i32, i32) {
    %c0_i32 = arith.constant 0 : i32
    %c0_i32_0 = arith.constant 0 : i32
    %c0_i32_1 = arith.constant 0 : i32
    return %c0_i32, %c0_i32_0 : i32, i32
  }
  func.func @transform_3(%arg0: i32) -> (i32, i32) {
    %c0_i32 = arith.constant 0 : i32
    %c0_i32_0 = arith.constant 0 : i32
    %c0_i32_1 = arith.constant 0 : i32
    return %c0_i32, %c0_i32_0 : i32, i32
  }
  func.func @transform_4(%arg0: i32) -> (i32, i32) {
    %c0_i32 = arith.constant 0 : i32
    %c0_i32_0 = arith.constant 0 : i32
    %c0_i32_1 = arith.constant 0 : i32
    return %c0_i32, %c0_i32_0 : i32, i32
  }
  func.func @transform_5(%arg0: i32) -> (i32, i32) {
    %c0_i32 = arith.constant 0 : i32
    %c0_i32_0 = arith.constant 0 : i32
    %c0_i32_1 = arith.constant 0 : i32
    return %c0_i32, %c0_i32_0 : i32, i32
  }
  func.func @transform_6(%arg0: i32) -> (i32, i32) {
    %c0_i32 = arith.constant 0 : i32
    %c0_i32_0 = arith.constant 0 : i32
    %c0_i32_1 = arith.constant 0 : i32
    return %c0_i32, %c0_i32_0 : i32, i32
  }
  func.func @transform_7(%arg0: i32) -> (i32, i32) {
    %c0_i32 = arith.constant 0 : i32
    %c0_i32_0 = arith.constant 0 : i32
    %c0_i32_1 = arith.constant 0 : i32
    return %c0_i32, %c0_i32_0 : i32, i32
  }
  func.func @transform_8(%arg0: i32) -> (i32, i32) {
    %c0_i32 = arith.constant 0 : i32
    %c0_i32_0 = arith.constant 0 : i32
    %c0_i32_1 = arith.constant 0 : i32
    return %c0_i32, %c0_i32_0 : i32, i32
  }
  func.func @transform_9(%arg0: i32) -> (i32, i32) {
    %c0_i32 = arith.constant 0 : i32
    %c0_i32_0 = arith.constant 0 : i32
    return %arg0, %c0_i32 : i32, i32
  }
}

</mosaic_0001>

<llo_original>
// kernel: tpu_custom_call.1
$region0: #{tpu_custom_call.1}
  #allocation0 [shape = 'u32[]', space=smem, size = 0x4, offset = 0x4, fixed_abs, tag = 'smem constant byte address 0x4 - core index']
  #allocation1 [shape = 'u32[144,128]{1,0:T(1,128)}', space=vmem, size = 0x12000, scoped, tag = 'internal scratch']
  %s0 = inlined_call_operand.vmem [shape: f32[2,32], index: 0, kind: input, shape index: {}]
  %s1 = inlined_call_operand.vmem [shape: f32[32,32], index: 1, kind: input, shape index: {}]
  %s2 = inlined_call_operand.hbm [shape: f32[1,32], index: 2, kind: input, shape index: {}]
  %s3 = inlined_call_operand.hbm [shape: f32[32,64], index: 3, kind: input, shape index: {}]
  %s4 = inlined_call_operand.hbm [shape: f32[1,64], index: 4, kind: input, shape index: {}]
  %s5 = inlined_call_operand.hbm [shape: f32[64,128], index: 5, kind: input, shape index: {}]
  %s6 = inlined_call_operand.hbm [shape: f32[1,128], index: 6, kind: input, shape index: {}]
  %s7 = inlined_call_operand.vmem [shape: f32[128,128], index: 7, kind: input, shape index: {}]
  %s8 = inlined_call_operand.vmem [shape: f32[128,8], index: 8, kind: input, shape index: {}]
  %s9 = inlined_call_operand.hbm [shape: f32[2,8], index: 9, kind: output, shape index: {}]
  %s10 = sld [smem:[#allocation0]]
  $region66: #{tpu_custom_call.1} parent=0
    _
  %s12 = ssub.s32 1, %s10
  %s13 = scalar_select 0, %s12, %s10
  $region1: #{tpu_custom_call.1} parent=0
    #allocation2 [shape = 'u8[512]{0}', space=vmem, size = 0x400, scoped, tag = 'input window, operand 2, single buffered']
    #allocation3 [shape = 's32[1]{0}', space=sflag, size = 0x4, scoped, tag = 'scoped memory for tpu_custom_call.1']
    #allocation4 [shape = 's32[1]{0}', space=sflag, size = 0x4, scoped, tag = 'scoped memory for tpu_custom_call.1']
    #allocation5 [shape = 'u8[16384]{0}', space=vmem, size = 0x4000, scoped, tag = 'input window, operand 3, single buffered']
    #allocation6 [shape = 's32[1]{0}', space=sflag, size = 0x4, scoped, tag = 'scoped memory for tpu_custom_call.1']
    #allocation7 [shape = 'u8[512]{0}', space=vmem, size = 0x400, scoped, tag = 'input window, operand 4, single buffered']
    #allocation8 [shape = 'u8[32768]{0}', space=vmem, size = 0x8000, scoped, tag = 'input window, operand 5, single buffered']
    #allocation9 [shape = 's32[1]{0}', space=sflag, size = 0x4, scoped, tag = 'scoped memory for tpu_custom_call.1']
    #allocation10 [shape = 'u8[512]{0}', space=vmem, size = 0x400, scoped, tag = 'input window, operand 6, single buffered']
    #allocation11 [shape = 'u8[1024]{0}', space=vmem, size = 0x400, scoped, tag = 'output window, operand 0, single buffered']
    %14 = vsyncpa [#allocation3], 0
    %15 = vsyncpa [#allocation6], 0
    %16 = vsyncpa [#allocation9], 0
    %17 = vsyncpa [#allocation4], 0
    // Predicated region
    $region2: #{tpu_custom_call.1} parent=1 // pred_check
      _
    $region3: #{tpu_custom_call.1} parent=1 // pred_check_branch
      %19 = sbr.rel (0) target = $region5
    $region4: #{tpu_custom_call.1} parent=1 // pred_region
      _
    $region5: #{tpu_custom_call.1} parent=1 // pred_fallthru
      _
    // Predicated region
    $region6: #{tpu_custom_call.1} parent=1 // pred_check
      _
    $region7: #{tpu_custom_call.1} parent=1 // pred_check_branch
      %21 = sbr.rel (0) target = $region9
    $region8: #{tpu_custom_call.1} parent=1 // pred_region
      _
    $region9: #{tpu_custom_call.1} parent=1 // pred_fallthru
      _
    // Predicated region
    $region10: #{tpu_custom_call.1} parent=1 // pred_check
      _
    $region11: #{tpu_custom_call.1} parent=1 // pred_check_branch
      %23 = sbr.rel (0) target = $region13
    $region12: #{tpu_custom_call.1} parent=1 // pred_region
      %s25 = ssub.s32 16, 16
      %26 = vsyncadd [#allocation3], %s25
      %s28 = sshll.u32 [#allocation2], 4
      %s29 = int_to_ptr.vmem [resolvable:$true] %s28
      %31 = dma.hbm_to_vmem [thread:$0]  %s2, 16, %s29, [#allocation3]
    $region13: #{tpu_custom_call.1} parent=1 // pred_fallthru
      _
    // Predicated region
    $region14: #{tpu_custom_call.1} parent=1 // pred_check
      _
    $region15: #{tpu_custom_call.1} parent=1 // pred_check_branch
      %33 = sbr.rel (0) target = $region17
    $region16: #{tpu_custom_call.1} parent=1 // pred_region
      %s35 = ssub.s32 512, 512
      %36 = vsyncadd [#allocation6], %s35
      %s37 = sshll.u32 [#allocation5], 4
      %s38 = int_to_ptr.vmem [resolvable:$true] %s37
      %43 = dma.hbm_to_vmem [thread:$0]  %s3, 512, %s38, [#allocation6], 128, 128, 8
    $region17: #{tpu_custom_call.1} parent=1 // pred_fallthru
      _
    // Predicated region
    $region18: #{tpu_custom_call.1} parent=1 // pred_check
      _
    $region19: #{tpu_custom_call.1} parent=1 // pred_check_branch
      %45 = sbr.rel (0) target = $region21
    $region20: #{tpu_custom_call.1} parent=1 // pred_region
      %s47 = ssub.s32 16, 16
      %48 = vsyncadd [#allocation6], %s47
      %s50 = sshll.u32 [#allocation7], 4
      %s51 = int_to_ptr.vmem [resolvable:$true] %s50
      %53 = dma.hbm_to_vmem [thread:$0]  %s4, 16, %s51, [#allocation6]
    $region21: #{tpu_custom_call.1} parent=1 // pred_fallthru
      _
    // Predicated region
    $region22: #{tpu_custom_call.1} parent=1 // pred_check
      _
    $region23: #{tpu_custom_call.1} parent=1 // pred_check_branch
      %55 = sbr.rel (0) target = $region25
    $region24: #{tpu_custom_call.1} parent=1 // pred_region
      %s57 = ssub.s32 1024, 1024
      %58 = vsyncadd [#allocation9], %s57
      %s59 = sshll.u32 [#allocation8], 4
      %s60 = int_to_ptr.vmem [resolvable:$true] %s59
      %65 = dma.hbm_to_vmem [thread:$0]  %s5, 1024, %s60, [#allocation9], 128, 128, 8
    $region25: #{tpu_custom_call.1} parent=1 // pred_fallthru
      _
    // Predicated region
    $region26: #{tpu_custom_call.1} parent=1 // pred_check
      _
    $region27: #{tpu_custom_call.1} parent=1 // pred_check_branch
      %67 = sbr.rel (0) target = $region29
    $region28: #{tpu_custom_call.1} parent=1 // pred_region
      %s69 = ssub.s32 16, 16
      %70 = vsyncadd [#allocation9], %s69
      %s72 = sshll.u32 [#allocation10], 4
      %s73 = int_to_ptr.vmem [resolvable:$true] %s72
      %75 = dma.hbm_to_vmem [thread:$0]  %s6, 16, %s73, [#allocation9]
    $region29: #{tpu_custom_call.1} parent=1 // pred_fallthru
      _
    // Predicated region
    $region30: #{tpu_custom_call.1} parent=1 // pred_check
      _
    $region31: #{tpu_custom_call.1} parent=1 // pred_check_branch
      %77 = sbr.rel (0) target = $region33
    $region32: #{tpu_custom_call.1} parent=1 // pred_region
      _
    $region33: #{tpu_custom_call.1} parent=1 // pred_fallthru
      _
    // Predicated region
    $region34: #{tpu_custom_call.1} parent=1 // pred_check
      _
    $region35: #{tpu_custom_call.1} parent=1 // pred_check_branch
      %79 = sbr.rel (0) target = $region37
    $region36: #{tpu_custom_call.1} parent=1 // pred_region
      _
    $region37: #{tpu_custom_call.1} parent=1 // pred_fallthru
      _
    // Predicated region
    $region38: #{tpu_custom_call.1} parent=1 // pred_check
      _
    $region39: #{tpu_custom_call.1} parent=1 // pred_check_branch
      %81 = sbr.rel (0) target = $region41
    $region40: #{tpu_custom_call.1} parent=1 // pred_region
      %82 = dma.done [#allocation3], 16
    $region41: #{tpu_custom_call.1} parent=1 // pred_fallthru
      _
    // Predicated region
    $region42: #{tpu_custom_call.1} parent=1 // pred_check
      _
    $region43: #{tpu_custom_call.1} parent=1 // pred_check_branch
      %84 = sbr.rel (0) target = $region45
    $region44: #{tpu_custom_call.1} parent=1 // pred_region
      %85 = dma.done [#allocation6], 512
    $region45: #{tpu_custom_call.1} parent=1 // pred_fallthru
      _
    // Predicated region
    $region46: #{tpu_custom_call.1} parent=1 // pred_check
      _
    $region47: #{tpu_custom_call.1} parent=1 // pred_check_branch
      %87 = sbr.rel (0) target = $region49
    $region48: #{tpu_custom_call.1} parent=1 // pred_region
      %88 = dma.done [#allocation6], 16
    $region49: #{tpu_custom_call.1} parent=1 // pred_fallthru
      _
    // Predicated region
    $region50: #{tpu_custom_call.1} parent=1 // pred_check
      _
    $region51: #{tpu_custom_call.1} parent=1 // pred_check_branch
      %90 = sbr.rel (0) target = $region53
    $region52: #{tpu_custom_call.1} parent=1 // pred_region
      %91 = dma.done [#allocation9], 1024
    $region53: #{tpu_custom_call.1} parent=1 // pred_fallthru
      _
    // Predicated region
    $region54: #{tpu_custom_call.1} parent=1 // pred_check
      _
    $region55: #{tpu_custom_call.1} parent=1 // pred_check_branch
      %93 = sbr.rel (0) target = $region57
    $region56: #{tpu_custom_call.1} parent=1 // pred_region
      %94 = dma.done [#allocation9], 16
    $region57: #{tpu_custom_call.1} parent=1 // pred_fallthru
      _
    %v95 = vld [vmem:[%s0] sm:$0x3]
    %v96 = vld [vmem:[%s1] sm:$0xff]
    %v97 = vld [vmem:[%s1 + $0x8] sm:$0xff]
    %v98 = vld [vmem:[%s1 + $0x10] sm:$0xff]
    %v99 = vld [vmem:[%s1 + $0x18] sm:$0xff]
    %v100 = vld [vmem:[#allocation2] sm:$0x1]
    %v102 = vlaneseq
    %v103 = vshrl.u32 %v102, 7
    %v104 = vsub.s32 0, %v103
    %v105 = vrot.slane %v100, %v104
    %vm107 = vcmask 261120
    %v109 = vsel %vm107, %v95, 0
    %111 = vmatprep.subr.mxu0 0.0
    %112 = vmatpush1.msra.mxu0 %v96
    %113 = vmatprep.subr.mxu0 0.0
    %114 = vmatpush1.msra.mxu0 %v97
    %115 = vmatprep.subr.mxu0 0.0
    %116 = vmatpush1.msra.mxu0 %v98
    %117 = vmatprep.subr.mxu0 0.0
    %118 = vmatpush1.msra.mxu0 %v99
    %119 = vmatprep.subr.mxu0 0.0
    %120 = vmatpush1.msra.mxu0 0.0
    %121 = vmatprep.subr.mxu0 0.0
    %122 = vmatpush1.msra.mxu0 0.0
    %123 = vmatprep.subr.mxu0 0.0
    %124 = vmatpush1.msra.mxu0 0.0
    %125 = vmatprep.subr.mxu0 0.0
    %126 = vmatpush1.msra.mxu0 0.0
    %127 = vmatprep.subr.mxu0 0.0
    %128 = vmatpush1.msra.mxu0 0.0
    %129 = vmatprep.subr.mxu0 0.0
    %130 = vmatpush1.msra.mxu0 0.0
    %131 = vmatprep.subr.mxu0 0.0
    %132 = vmatpush1.msra.mxu0 0.0
    %133 = vmatprep.subr.mxu0 0.0
    %134 = vmatpush1.msra.mxu0 0.0
    %135 = vmatprep.subr.mxu0 0.0
    %136 = vmatpush1.msra.mxu0 0.0
    %137 = vmatprep.subr.mxu0 0.0
    %138 = vmatpush1.msra.mxu0 0.0
    %139 = vmatprep.subr.mxu0 0.0
    %140 = vmatpush1.msra.mxu0 0.0
    %141 = vmatprep.subr.mxu0 0.0
    %142 = vmatpush1.msra.mxu0 0.0
    %143 = vmatprep.subr.mxu0 0.0
    %144 = vmatpush1.msra.mxu0 0.0
    %145 = vmatprep.subr.mxu0 0.0
    %146 = vmatpush1.msra.mxu0 0.0
    %147 = vmatprep.subr.mxu0 0.0
    %148 = vmatpush1.msra.mxu0 0.0
    %149 = vmatprep.subr.mxu0 0.0
    %150 = vmatpush1.msra.mxu0 0.0
    %151 = vmatprep.subr.mxu0 0.0
    %152 = vmatpush1.msra.mxu0 0.0
    %153 = vmatprep.subr.mxu0 0.0
    %154 = vmatpush1.msra.mxu0 0.0
    %155 = vmatprep.subr.mxu0 0.0
    %156 = vmatpush1.msra.mxu0 0.0
    %157 = vmatprep.subr.mxu0 0.0
    %158 = vmatpush1.msra.mxu0 0.0
    %159 = vmatprep.subr.mxu0 0.0
    %160 = vmatpush1.msra.mxu0 0.0
    %161 = vmatprep.subr.mxu0 0.0
    %162 = vmatpush1.msra.mxu0 0.0
    %163 = vmatprep.subr.mxu0 0.0
    %164 = vmatpush1.msra.mxu0 0.0
    %165 = vmatprep.subr.mxu0 0.0
    %166 = vmatpush1.msra.mxu0 0.0
    %167 = vmatprep.subr.mxu0 0.0
    %168 = vmatpush1.msra.mxu0 0.0
    %169 = vmatprep.subr.mxu0 0.0
    %170 = vmatpush1.msra.mxu0 0.0
    %171 = vmatprep.subr.mxu0 0.0
    %172 = vmatpush1.msra.mxu0 0.0
    %173 = vmatprep.subr.mxu0 0.0
    %174 = vmatpush1.msra.mxu0 0.0
    %175 = vmatprep.mubr.f32.mxu0 0.0
    %176 = vmatmul.mubr.f32.gmra.mrb[0].mxu0 %v109
    %v177 = vpop.f32.mrb[0].mxu0
    %v178 = vadd.f32 %v105, %v177
    %v179 = vpop.f32.mrb[0].mxu0
    %180 = vdwg.mxu0
    %v181 = vmax.f32 %v178, 0.0
    %v182 = vld [vmem:[#allocation5] sm:$0xff]
    %v183 = vld [vmem:[#allocation5 + $0x8] sm:$0xff]
    %v184 = vld [vmem:[#allocation5 + $0x10] sm:$0xff]
    %v185 = vld [vmem:[#allocation5 + $0x18] sm:$0xff]
    %v186 = vld [vmem:[#allocation7] sm:$0x1]
    %v188 = vlaneseq
    %v189 = vshrl.u32 %v188, 7
    %v190 = vsub.s32 0, %v189
    %v191 = vrot.slane %v186, %v190
    %v194 = vsel %vm107, %v181, 0
    %196 = vmatprep.subr.mxu0 0.0
    %197 = vmatpush1.msra.mxu0 %v182
    %198 = vmatprep.subr.mxu0 0.0
    %199 = vmatpush1.msra.mxu0 %v183
    %200 = vmatprep.subr.mxu0 0.0
    %201 = vmatpush1.msra.mxu0 %v184
    %202 = vmatprep.subr.mxu0 0.0
    %203 = vmatpush1.msra.mxu0 %v185
    %204 = vmatprep.subr.mxu0 0.0
    %205 = vmatpush1.msra.mxu0 0.0
    %206 = vmatprep.subr.mxu0 0.0
    %207 = vmatpush1.msra.mxu0 0.0
    %208 = vmatprep.subr.mxu0 0.0
    %209 = vmatpush1.msra.mxu0 0.0
    %210 = vmatprep.subr.mxu0 0.0
    %211 = vmatpush1.msra.mxu0 0.0
    %212 = vmatprep.subr.mxu0 0.0
    %213 = vmatpush1.msra.mxu0 0.0
    %214 = vmatprep.subr.mxu0 0.0
    %215 = vmatpush1.msra.mxu0 0.0
    %216 = vmatprep.subr.mxu0 0.0
    %217 = vmatpush1.msra.mxu0 0.0
    %218 = vmatprep.subr.mxu0 0.0
    %219 = vmatpush1.msra.mxu0 0.0
    %220 = vmatprep.subr.mxu0 0.0
    %221 = vmatpush1.msra.mxu0 0.0
    %222 = vmatprep.subr.mxu0 0.0
    %223 = vmatpush1.msra.mxu0 0.0
    %224 = vmatprep.subr.mxu0 0.0
    %225 = vmatpush1.msra.mxu0 0.0
    %226 = vmatprep.subr.mxu0 0.0
    %227 = vmatpush1.msra.mxu0 0.0
    %228 = vmatprep.subr.mxu0 0.0
    %229 = vmatpush1.msra.mxu0 0.0
    %230 = vmatprep.subr.mxu0 0.0
    %231 = vmatpush1.msra.mxu0 0.0
    %232 = vmatprep.subr.mxu0 0.0
    %233 = vmatpush1.msra.mxu0 0.0
    %234 = vmatprep.subr.mxu0 0.0
    %235 = vmatpush1.msra.mxu0 0.0
    %236 = vmatprep.subr.mxu0 0.0
    %237 = vmatpush1.msra.mxu0 0.0
    %238 = vmatprep.subr.mxu0 0.0
    %239 = vmatpush1.msra.mxu0 0.0
    %240 = vmatprep.subr.mxu0 0.0
    %241 = vmatpush1.msra.mxu0 0.0
    %242 = vmatprep.subr.mxu0 0.0
    %243 = vmatpush1.msra.mxu0 0.0
    %244 = vmatprep.subr.mxu0 0.0
    %245 = vmatpush1.msra.mxu0 0.0
    %246 = vmatprep.subr.mxu0 0.0
    %247 = vmatpush1.msra.mxu0 0.0
    %248 = vmatprep.subr.mxu0 0.0
    %249 = vmatpush1.msra.mxu0 0.0
    %250 = vmatprep.subr.mxu0 0.0
    %251 = vmatpush1.msra.mxu0 0.0
    %252 = vmatprep.subr.mxu0 0.0
    %253 = vmatpush1.msra.mxu0 0.0
    %254 = vmatprep.subr.mxu0 0.0
    %255 = vmatpush1.msra.mxu0 0.0
    %256 = vmatprep.subr.mxu0 0.0
    %257 = vmatpush1.msra.mxu0 0.0
    %258 = vmatprep.subr.mxu0 0.0
    %259 = vmatpush1.msra.mxu0 0.0
    %260 = vmatprep.mubr.f32.mxu0 0.0
    %261 = vmatmul.mubr.f32.gmra.mrb[0].mxu0 %v194
    %v262 = vpop.f32.mrb[0].mxu0
    %v263 = vadd.f32 %v191, %v262
    %v264 = vpop.f32.mrb[0].mxu0
    %265 = vdwg.mxu0
    %v266 = vmax.f32 %v263, 0.0
    %v267 = vld [vmem:[#allocation8] sm:$0xff]
    %v268 = vld [vmem:[#allocation8 + $0x8] sm:$0xff]
    %v269 = vld [vmem:[#allocation8 + $0x10] sm:$0xff]
    %v270 = vld [vmem:[#allocation8 + $0x18] sm:$0xff]
    %v271 = vld [vmem:[#allocation8 + $0x20] sm:$0xff]
    %v272 = vld [vmem:[#allocation8 + $0x28] sm:$0xff]
    %v273 = vld [vmem:[#allocation8 + $0x30] sm:$0xff]
    %v274 = vld [vmem:[#allocation8 + $0x38] sm:$0xff]
    %v275 = vld [vmem:[#allocation10] sm:$0x1]
    %v277 = vlaneseq
    %v278 = vshrl.u32 %v277, 7
    %v279 = vsub.s32 0, %v278
    %v280 = vrot.slane %v275, %v279
    %vm282 = vcmask 523264
    %v284 = vsel %vm282, %v266, 0
    %286 = vmatprep.subr.mxu0 0.0
    %287 = vmatpush1.msra.mxu0 %v267
    %288 = vmatprep.subr.mxu0 0.0
    %289 = vmatpush1.msra.mxu0 %v268
    %290 = vmatprep.subr.mxu0 0.0
    %291 = vmatpush1.msra.mxu0 %v269
    %292 = vmatprep.subr.mxu0 0.0
    %293 = vmatpush1.msra.mxu0 %v270
    %294 = vmatprep.subr.mxu0 0.0
    %295 = vmatpush1.msra.mxu0 %v271
    %296 = vmatprep.subr.mxu0 0.0
    %297 = vmatpush1.msra.mxu0 %v272
    %298 = vmatprep.subr.mxu0 0.0
    %299 = vmatpush1.msra.mxu0 %v273
    %300 = vmatprep.subr.mxu0 0.0
    %301 = vmatpush1.msra.mxu0 %v274
    %302 = vmatprep.subr.mxu0 0.0
    %303 = vmatpush1.msra.mxu0 0.0
    %304 = vmatprep.subr.mxu0 0.0
    %305 = vmatpush1.msra.mxu0 0.0
    %306 = vmatprep.subr.mxu0 0.0
    %307 = vmatpush1.msra.mxu0 0.0
    %308 = vmatprep.subr.mxu0 0.0
    %309 = vmatpush1.msra.mxu0 0.0
    %310 = vmatprep.subr.mxu0 0.0
    %311 = vmatpush1.msra.mxu0 0.0
    %312 = vmatprep.subr.mxu0 0.0
    %313 = vmatpush1.msra.mxu0 0.0
    %314 = vmatprep.subr.mxu0 0.0
    %315 = vmatpush1.msra.mxu0 0.0
    %316 = vmatprep.subr.mxu0 0.0
    %317 = vmatpush1.msra.mxu0 0.0
    %318 = vmatprep.subr.mxu0 0.0
    %319 = vmatpush1.msra.mxu0 0.0
    %320 = vmatprep.subr.mxu0 0.0
    %321 = vmatpush1.msra.mxu0 0.0
    %322 = vmatprep.subr.mxu0 0.0
    %323 = vmatpush1.msra.mxu0 0.0
    %324 = vmatprep.subr.mxu0 0.0
    %325 = vmatpush1.msra.mxu0 0.0
    %326 = vmatprep.subr.mxu0 0.0
    %327 = vmatpush1.msra.mxu0 0.0
    %328 = vmatprep.subr.mxu0 0.0
    %329 = vmatpush1.msra.mxu0 0.0
    %330 = vmatprep.subr.mxu0 0.0
    %331 = vmatpush1.msra.mxu0 0.0
    %332 = vmatprep.subr.mxu0 0.0
    %333 = vmatpush1.msra.mxu0 0.0
    %334 = vmatprep.subr.mxu0 0.0
    %335 = vmatpush1.msra.mxu0 0.0
    %336 = vmatprep.subr.mxu0 0.0
    %337 = vmatpush1.msra.mxu0 0.0
    %338 = vmatprep.subr.mxu0 0.0
    %339 = vmatpush1.msra.mxu0 0.0
    %340 = vmatprep.subr.mxu0 0.0
    %341 = vmatpush1.msra.mxu0 0.0
    %342 = vmatprep.subr.mxu0 0.0
    %343 = vmatpush1.msra.mxu0 0.0
    %344 = vmatprep.subr.mxu0 0.0
    %345 = vmatpush1.msra.mxu0 0.0
    %346 = vmatprep.subr.mxu0 0.0
    %347 = vmatpush1.msra.mxu0 0.0
    %348 = vmatprep.subr.mxu0 0.0
    %349 = vmatpush1.msra.mxu0 0.0
    %350 = vmatprep.mubr.f32.mxu0 0.0
    %351 = vmatmul.mubr.f32.gmra.mrb[0].mxu0 %v284
    %v352 = vpop.f32.mrb[0].mxu0
    %v353 = vadd.f32 %v280, %v352
    %v354 = vpop.f32.mrb[0].mxu0
    %355 = vdwg.mxu0
    %vm356 = vcmask 1041408
    %v357 = vsel %vm356, %v353, -inf
    %358 = vmax.xlane.f32.xlu0 %v357
    %v359 = vpop.xlane.xlu0 %358
    %v360 = vsub.f32 %v353, %v359
    %v361 = vmul.f32 %v360, 1.442695
    %v362 = vpow.pop %v361
    %v363 = vld [vmem:[%s7] sm:$0xff]
    %v364 = vld [vmem:[%s7 + $0x8] sm:$0xff]
    %v365 = vld [vmem:[%s7 + $0x10] sm:$0xff]
    %v366 = vld [vmem:[%s7 + $0x18] sm:$0xff]
    %v367 = vld [vmem:[%s7 + $0x20] sm:$0xff]
    %v368 = vld [vmem:[%s7 + $0x28] sm:$0xff]
    %v369 = vld [vmem:[%s7 + $0x30] sm:$0xff]
    %v370 = vld [vmem:[%s7 + $0x38] sm:$0xff]
    %v371 = vld [vmem:[%s7 + $0x40] sm:$0xff]
    %v372 = vld [vmem:[%s7 + $0x48] sm:$0xff]
    %v373 = vld [vmem:[%s7 + $0x50] sm:$0xff]
    %v374 = vld [vmem:[%s7 + $0x58] sm:$0xff]
    %v375 = vld [vmem:[%s7 + $0x60] sm:$0xff]
    %v376 = vld [vmem:[%s7 + $0x68] sm:$0xff]
    %v377 = vld [vmem:[%s7 + $0x70] sm:$0xff]
    %v378 = vld [vmem:[%s7 + $0x78] sm:$0xff]
    %379 = vmatprep.subr.mxu0 0.0
    %380 = vmatpush1.msra.mxu0 %v363
    %381 = vmatprep.subr.mxu0 0.0
    %382 = vmatpush1.msra.mxu0 %v364
    %383 = vmatprep.subr.mxu0 0.0
    %384 = vmatpush1.msra.mxu0 %v365
    %385 = vmatprep.subr.mxu0 0.0
    %386 = vmatpush1.msra.mxu0 %v366
    %387 = vmatprep.subr.mxu0 0.0
    %388 = vmatpush1.msra.mxu0 %v367
    %389 = vmatprep.subr.mxu0 0.0
    %390 = vmatpush1.msra.mxu0 %v368
    %391 = vmatprep.subr.mxu0 0.0
    %392 = vmatpush1.msra.mxu0 %v369
    %393 = vmatprep.subr.mxu0 0.0
    %394 = vmatpush1.msra.mxu0 %v370
    %395 = vmatprep.subr.mxu0 0.0
    %396 = vmatpush1.msra.mxu0 %v371
    %397 = vmatprep.subr.mxu0 0.0
    %398 = vmatpush1.msra.mxu0 %v372
    %399 = vmatprep.subr.mxu0 0.0
    %400 = vmatpush1.msra.mxu0 %v373
    %401 = vmatprep.subr.mxu0 0.0
    %402 = vmatpush1.msra.mxu0 %v374
    %403 = vmatprep.subr.mxu0 0.0
    %404 = vmatpush1.msra.mxu0 %v375
    %405 = vmatprep.subr.mxu0 0.0
    %406 = vmatpush1.msra.mxu0 %v376
    %407 = vmatprep.subr.mxu0 0.0
    %408 = vmatpush1.msra.mxu0 %v377
    %409 = vmatprep.subr.mxu0 0.0
    %410 = vmatpush1.msra.mxu0 %v378
    %411 = vmatprep.subr.mxu0 0.0
    %412 = vmatpush1.msra.mxu0 0.0
    %413 = vmatprep.subr.mxu0 0.0
    %414 = vmatpush1.msra.mxu0 0.0
    %415 = vmatprep.subr.mxu0 0.0
    %416 = vmatpush1.msra.mxu0 0.0
    %417 = vmatprep.subr.mxu0 0.0
    %418 = vmatpush1.msra.mxu0 0.0
    %419 = vmatprep.subr.mxu0 0.0
    %420 = vmatpush1.msra.mxu0 0.0
    %421 = vmatprep.subr.mxu0 0.0
    %422 = vmatpush1.msra.mxu0 0.0
    %423 = vmatprep.subr.mxu0 0.0
    %424 = vmatpush1.msra.mxu0 0.0
    %425 = vmatprep.subr.mxu0 0.0
    %426 = vmatpush1.msra.mxu0 0.0
    %427 = vmatprep.subr.mxu0 0.0
    %428 = vmatpush1.msra.mxu0 0.0
    %429 = vmatprep.subr.mxu0 0.0
    %430 = vmatpush1.msra.mxu0 0.0
    %431 = vmatprep.subr.mxu0 0.0
    %432 = vmatpush1.msra.mxu0 0.0
    %433 = vmatprep.subr.mxu0 0.0
    %434 = vmatpush1.msra.mxu0 0.0
    %435 = vmatprep.subr.mxu0 0.0
    %436 = vmatpush1.msra.mxu0 0.0
    %437 = vmatprep.subr.mxu0 0.0
    %438 = vmatpush1.msra.mxu0 0.0
    %439 = vmatprep.subr.mxu0 0.0
    %440 = vmatpush1.msra.mxu0 0.0
    %441 = vmatprep.subr.mxu0 0.0
    %442 = vmatpush1.msra.mxu0 0.0
    %443 = vmatprep.mubr.f32.mxu0 0.0
    %444 = vmatmul.mubr.f32.gmra.mrb[0].mxu0 %v362
    %v445 = vpop.f32.mrb[0].mxu0
    %v446 = vadd.f32 0.0, %v445
    %v447 = vpop.f32.mrb[0].mxu0
    %448 = vdwg.mxu0
    %v449 = vrcp.pop %v446
    %v450 = vmul.f32 %v362, %v449
    %v451 = vmax.f32 %v450, 0.001
    %v452 = vld [vmem:[%s8] sm:$0xff]
    %v453 = vld [vmem:[%s8 + $0x8] sm:$0xff]
    %v454 = vld [vmem:[%s8 + $0x10] sm:$0xff]
    %v455 = vld [vmem:[%s8 + $0x18] sm:$0xff]
    %v456 = vld [vmem:[%s8 + $0x20] sm:$0xff]
    %v457 = vld [vmem:[%s8 + $0x28] sm:$0xff]
    %v458 = vld [vmem:[%s8 + $0x30] sm:$0xff]
    %v459 = vld [vmem:[%s8 + $0x38] sm:$0xff]
    %v460 = vld [vmem:[%s8 + $0x40] sm:$0xff]
    %v461 = vld [vmem:[%s8 + $0x48] sm:$0xff]
    %v462 = vld [vmem:[%s8 + $0x50] sm:$0xff]
    %v463 = vld [vmem:[%s8 + $0x58] sm:$0xff]
    %v464 = vld [vmem:[%s8 + $0x60] sm:$0xff]
    %v465 = vld [vmem:[%s8 + $0x68] sm:$0xff]
    %v466 = vld [vmem:[%s8 + $0x70] sm:$0xff]
    %v467 = vld [vmem:[%s8 + $0x78] sm:$0xff]
    %468 = vmatprep.subr.mxu0 0.0
    %469 = vmatpush1.msra.mxu0 %v452
    %470 = vmatprep.subr.mxu0 0.0
    %471 = vmatpush1.msra.mxu0 %v453
    %472 = vmatprep.subr.mxu0 0.0
    %473 = vmatpush1.msra.mxu0 %v454
    %474 = vmatprep.subr.mxu0 0.0
    %475 = vmatpush1.msra.mxu0 %v455
    %476 = vmatprep.subr.mxu0 0.0
    %477 = vmatpush1.msra.mxu0 %v456
    %478 = vmatprep.subr.mxu0 0.0
    %479 = vmatpush1.msra.mxu0 %v457
    %480 = vmatprep.subr.mxu0 0.0
    %481 = vmatpush1.msra.mxu0 %v458
    %482 = vmatprep.subr.mxu0 0.0
    %483 = vmatpush1.msra.mxu0 %v459
    %484 = vmatprep.subr.mxu0 0.0
    %485 = vmatpush1.msra.mxu0 %v460
    %486 = vmatprep.subr.mxu0 0.0
    %487 = vmatpush1.msra.mxu0 %v461
    %488 = vmatprep.subr.mxu0 0.0
    %489 = vmatpush1.msra.mxu0 %v462
    %490 = vmatprep.subr.mxu0 0.0
    %491 = vmatpush1.msra.mxu0 %v463
    %492 = vmatprep.subr.mxu0 0.0
    %493 = vmatpush1.msra.mxu0 %v464
    %494 = vmatprep.subr.mxu0 0.0
    %495 = vmatpush1.msra.mxu0 %v465
    %496 = vmatprep.subr.mxu0 0.0
    %497 = vmatpush1.msra.mxu0 %v466
    %498 = vmatprep.subr.mxu0 0.0
    %499 = vmatpush1.msra.mxu0 %v467
    %500 = vmatprep.subr.mxu0 0.0
    %501 = vmatpush1.msra.mxu0 0.0
    %502 = vmatprep.subr.mxu0 0.0
    %503 = vmatpush1.msra.mxu0 0.0
    %504 = vmatprep.subr.mxu0 0.0
    %505 = vmatpush1.msra.mxu0 0.0
    %506 = vmatprep.subr.mxu0 0.0
    %507 = vmatpush1.msra.mxu0 0.0
    %508 = vmatprep.subr.mxu0 0.0
    %509 = vmatpush1.msra.mxu0 0.0
    %510 = vmatprep.subr.mxu0 0.0
    %511 = vmatpush1.msra.mxu0 0.0
    %512 = vmatprep.subr.mxu0 0.0
    %513 = vmatpush1.msra.mxu0 0.0
    %514 = vmatprep.subr.mxu0 0.0
    %515 = vmatpush1.msra.mxu0 0.0
    %516 = vmatprep.subr.mxu0 0.0
    %517 = vmatpush1.msra.mxu0 0.0
    %518 = vmatprep.subr.mxu0 0.0
    %519 = vmatpush1.msra.mxu0 0.0
    %520 = vmatprep.subr.mxu0 0.0
    %521 = vmatpush1.msra.mxu0 0.0
    %522 = vmatprep.subr.mxu0 0.0
    %523 = vmatpush1.msra.mxu0 0.0
    %524 = vmatprep.subr.mxu0 0.0
    %525 = vmatpush1.msra.mxu0 0.0
    %526 = vmatprep.subr.mxu0 0.0
    %527 = vmatpush1.msra.mxu0 0.0
    %528 = vmatprep.subr.mxu0 0.0
    %529 = vmatpush1.msra.mxu0 0.0
    %530 = vmatprep.subr.mxu0 0.0
    %531 = vmatpush1.msra.mxu0 0.0
    %532 = vmatprep.mubr.f32.mxu0 0.0
    %533 = vmatmul.mubr.f32.gmra.mrb[0].mxu0 %v451
    %v534 = vpop.f32.mrb[0].mxu0
    %v535 = vadd.f32 0.0, %v534
    %v536 = vpop.f32.mrb[0].mxu0
    %537 = vdwg.mxu0
    %vm538 = vcmask 58368
    %539 = vst.msk [vmem:[#allocation11] sm:$0x3] %vm538, %v535
    // Predicated region
    $region58: #{tpu_custom_call.1} parent=1 // pred_check
      _
    $region59: #{tpu_custom_call.1} parent=1 // pred_check_branch
      %541 = sbr.rel (0) target = $region61
    $region60: #{tpu_custom_call.1} parent=1 // pred_region
      %s543 = ssub.s32 32, 32
      %544 = vsyncadd [#allocation4], %s543
      %s546 = sshll.u32 [#allocation11], 4
      %s547 = int_to_ptr.vmem [resolvable:$true] %s546
      %549 = dma.vmem_to_hbm [thread:$0]  %s547, 32, %s9, [#allocation4]
    $region61: #{tpu_custom_call.1} parent=1 // pred_fallthru
      _
    // Predicated region
    $region62: #{tpu_custom_call.1} parent=1 // pred_check
      _
    $region63: #{tpu_custom_call.1} parent=1 // pred_check_branch
      %551 = sbr.rel (0) target = $region65
    $region64: #{tpu_custom_call.1} parent=1 // pred_region
      %552 = dma.done [#allocation4], 32
    $region65: #{tpu_custom_call.1} parent=1 // pred_fallthru
      _
    %553 = vsyncpa [#allocation3], 1
    %554 = vsyncpa [#allocation6], 1
    %555 = vsyncpa [#allocation9], 1
    %556 = vsyncpa [#allocation4], 1

</llo_original>
